<compile_context>
chip_gen: v7x
topology: tpu7x:2x2x1
jax: 0.10.0
libtpu: 0.0.40
codegen_flags: <defaults>
</compile_context>

<pallas_src>
import functools

import jax
import jax.numpy as jnp
from jax.experimental import pallas as pl
from jax.experimental.pallas import tpu as pltpu

COND_DIM = 256          # conditioning vector y has 256 features (hard-coded in the module)

ROW_TILE = 256          # sublane axis (B*C), multiple of 8
LANE_TILE = 2048        # lane axis (H*W), multiple of 128
_PALLAS_MIN_BYTES = 1 << 20   # below this, plain-JAX fallback (launch overhead dominates)


def _cdiv(a, b):
    return -(-a // b)


def _round_up(a, m):
    return _cdiv(a, m) * m


# ---------------------------------------------------------------------------
# Pallas kernel: per-row affine modulation   out = gamma * x + beta
#   x_ref  : (TR, TL)  in x.dtype
#   gb_ref : (TR, 2)   float32   (col 0 = gamma, col 1 = beta)
# ---------------------------------------------------------------------------
def _affine_kernel(x_ref, gb_ref, o_ref):
    g = gb_ref[:, 0:1]
    b = gb_ref[:, 1:2]
    o_ref[...] = (g * x_ref[...] + b).astype(o_ref.dtype)


# ---------------------------------------------------------------------------
# Tile selection.
#  * Tile is either the full extent (always legal) or a multiple of (8,128)
#    bounded by ROW_TILE/LANE_TILE; partial last blocks are handled by a
#    pl.cdiv grid (masked stores), so odd H*W never produces a huge block.
#  * If the grid would be a single block, split one axis so a 2-TC chip (v7x)
#    gets >= 2 parallel blocks.
# ---------------------------------------------------------------------------
def _pick_tiles(R, HW):
    tr = R if R <= ROW_TILE else ROW_TILE
    tl = HW if HW <= LANE_TILE else LANE_TILE
    if _cdiv(R, tr) * _cdiv(HW, tl) < 2:
        if R >= 16:
            tr = _round_up(_cdiv(R, 2), 8)
        elif HW >= 256:
            tl = _round_up(_cdiv(HW, 2), 128)
    return tr, tl


def _vmem_limit_bytes():
    # Generation-aware: ~half of physical VMEM, never below 32 MiB (v7x) nor
    # above 100 MiB (v5e/v6e have 128 MiB).
    try:
        cap = getattr(pltpu.get_tpu_info(), "vmem_capacity_bytes", 64 * 1024 * 1024)
    except Exception:
        cap = 64 * 1024 * 1024
    return int(min(max(cap // 2, 32 * 1024 * 1024), 100 * 1024 * 1024))


# ---------------------------------------------------------------------------
# Pallas apply:   out[r, l] = gb[r, 0] * x[r, l] + gb[r, 1]
# ---------------------------------------------------------------------------
def _affine_apply_pallas(x2, gb):
    R, HW = x2.shape
    tr, tl = _pick_tiles(R, HW)
    grid = (_cdiv(R, tr), _cdiv(HW, tl))        # lane axis innermost

    itemsize = jnp.dtype(x2.dtype).itemsize
    cost = pl.CostEstimate(
        flops=2 * R * HW,
        transcendentals=0,
        bytes_accessed=2 * R * HW * itemsize + 2 * R * 4,
    )

    return pl.pallas_call(
        _affine_kernel,
        out_shape=jax.ShapeDtypeStruct((R, HW), x2.dtype),
        grid=grid,
        in_specs=[
            pl.BlockSpec((tr, tl), lambda r, l: (r, l)),
            pl.BlockSpec((tr, 2), lambda r, l: (r, 0)),
        ],
        out_specs=pl.BlockSpec((tr, tl), lambda r, l: (r, l)),
        compiler_params=pltpu.CompilerParams(
            dimension_semantics=("parallel", "parallel"),
            vmem_limit_bytes=_vmem_limit_bytes(),
        ),
        cost_estimate=cost,
    )(x2, gb)


# ---------------------------------------------------------------------------
# Parameter init (deterministic, mimics PyTorch defaults + module._initialize)
# Weights stored as (in_features, out_features) — transposed vs torch Linear.
# ---------------------------------------------------------------------------
def init_affine_params(key, num_features):
    bound = 1.0 / (COND_DIM ** 0.5)
    k1, k2, k3, k4 = jax.random.split(key, 4)
    return dict(
        w1g=jax.random.uniform(k1, (COND_DIM, COND_DIM), jnp.float32, -bound, bound),
        b1g=jax.random.uniform(k2, (1, COND_DIM), jnp.float32, -bound, bound),
        w2g=jnp.zeros((COND_DIM, num_features), jnp.float32),        # init.zeros_
        b2g=jnp.ones((1, num_features), jnp.float32),                # init.ones_
        w1b=jax.random.uniform(k3, (COND_DIM, COND_DIM), jnp.float32, -bound, bound),
        b1b=jax.random.uniform(k4, (1, COND_DIM), jnp.float32, -bound, bound),
        w2b=jnp.zeros((COND_DIM, num_features), jnp.float32),        # init.zeros_
        b2b=jnp.zeros((1, num_features), jnp.float32),               # init.zeros_
    )


# ---------------------------------------------------------------------------
# Forward
# ---------------------------------------------------------------------------
def affine_forward(params, x, y, *, force_pallas=False):
    B, C, H, W = x.shape
    assert y.shape == (B, COND_DIM)

    # --- gamma / beta: tiny MLPs in plain JAX (both branches as one wide dot).
    w1 = jnp.concatenate([params["w1g"], params["w1b"]], axis=1)     # (256, 512)
    b1 = jnp.concatenate([params["b1g"], params["b1b"]], axis=1)     # (1, 512)
    h = jnp.maximum(y @ w1 + b1, 0.0)                                # (B, 512)
    gamma = h[:, :COND_DIM] @ params["w2g"] + params["b2g"]          # (B, C) f32
    beta = h[:, COND_DIM:] @ params["w2b"] + params["b2b"]           # (B, C) f32

    R = B * C
    HW = H * W
    x_bytes = R * HW * jnp.dtype(x.dtype).itemsize

    # --- small-input fallback: XLA's fused elementwise beats a Pallas launch.
    if not force_pallas and x_bytes < _PALLAS_MIN_BYTES:
        out = gamma[:, :, None, None] * x + beta[:, :, None, None]
        return out.astype(x.dtype)

    # --- Pallas affine apply --------------------------------------------------
    x2 = x.reshape(R, HW)
    gb = jnp.stack(
        [gamma.reshape(R).astype(jnp.float32), beta.reshape(R).astype(jnp.float32)],
        axis=1,
    )                                                                # (R, 2) f32
    out2 = _affine_apply_pallas(x2, gb)
    return out2.reshape(B, C, H, W)


affine_forward_jit = jax.jit(affine_forward, static_argnames=("force_pallas",))


# ---------------------------------------------------------------------------
# Pure-JAX reference for validation
# ---------------------------------------------------------------------------
def affine_reference(params, x, y):
    hg = jnp.maximum(y @ params["w1g"] + params["b1g"], 0.0)
    gamma = hg @ params["w2g"] + params["b2g"]
    hb = jnp.maximum(y @ params["w1b"] + params["b1b"], 0.0)
    beta = hb @ params["w2b"] + params["b2b"]
    return gamma[:, :, None, None] * x + beta[:, :, None, None]


if __name__ == "__main__":
    key = jax.random.PRNGKey(0)

    # --- test 1: module-sized input (batch=2, channels=4, 16x16), forced
    #     through the Pallas kernel so the kernel path is exercised. ----------
    B, C, H, W = 2, 4, 16, 16
    kp, kx, ky = jax.random.split(key, 3)
    params = init_affine_params(kp, num_features=C)
    x = jax.random.normal(kx, (B, C, H, W), dtype=jnp.float32)
    y = jax.random.normal(ky, (B, COND_DIM), dtype=jnp.float32)

    out = jax.block_until_ready(affine_forward_jit(params, x, y, force_pallas=True))
    ref = affine_reference(params, x, y)
    assert out.shape == (B, C, H, W)
    assert jnp.allclose(out, ref, atol=1e-5, rtol=1e-5), "mismatch vs reference (small)"

    # Same shape through the small-input fallback path (default behaviour).
    out_fb = jax.block_until_ready(affine_forward_jit(params, x, y))
    assert jnp.allclose(out_fb, ref, atol=1e-5, rtol=1e-5), "mismatch vs reference (fallback)"

    # --- test 2: non-trivial gamma/beta (random second-layer weights) on a
    #     shape whose H*W (48*48=2304) exercises the cdiv grid with a masked
    #     partial lane block, plus the row-split for 2-TC coverage. -----------
    B2, C2, H2, W2 = 2, 16, 48, 48
    kp2, kx2, ky2, kw = jax.random.split(jax.random.PRNGKey(1), 4)
    params2 = init_affine_params(kp2, num_features=C2)
    kwa, kwb, kba, kbb = jax.random.split(kw, 4)
    params2["w2g"] = jax.random.normal(kwa, (COND_DIM, C2), jnp.float32) * 0.05
    params2["b2g"] = jax.random.normal(kba, (1, C2), jnp.float32)
    params2["w2b"] = jax.random.normal(kwb, (COND_DIM, C2), jnp.float32) * 0.05
    params2["b2b"] = jax.random.normal(kbb, (1, C2), jnp.float32)
    x2 = jax.random.normal(kx2, (B2, C2, H2, W2), dtype=jnp.float32)
    y2 = jax.random.normal(ky2, (B2, COND_DIM), dtype=jnp.float32)

    out2 = jax.block_until_ready(affine_forward_jit(params2, x2, y2, force_pallas=True))
    ref2 = affine_reference(params2, x2, y2)
    assert out2.shape == (B2, C2, H2, W2)
    assert jnp.allclose(out2, ref2, atol=1e-4, rtol=1e-4), "mismatch vs reference (tiled)"

    print("KERNEL_OK")
</pallas_src>

<mosaic_0001>
module attributes {stable_mosaic.version = 11 : i64} {
  func.func @_affine_kernel(%arg0: i32, %arg1: i32, %arg2: memref<8x128xf32, #tpu.memory_space<vmem>>, %arg3: memref<8x2xf32, #tpu.memory_space<vmem>>, %arg4: memref<8x128xf32, #tpu.memory_space<vmem>>) attributes {dimension_semantics = [#tpu.dimension_semantics<parallel>, #tpu.dimension_semantics<parallel>], iteration_bounds = array<i64: 1, 2>, scalar_prefetch = 0 : i64, scratch_operands = 0 : i64, tpu.core_type = #tpu.core_type<tc>, window_params = [{transform_indices = @transform_0, window_bounds = array<i64: 8, 128>}, {transform_indices = @transform_1, window_bounds = array<i64: 8, 2>}, {transform_indices = @transform_2, window_bounds = array<i64: 8, 128>}]} {
    %c0 = arith.constant 0 : index
    %c0_0 = arith.constant 0 : index
    %0 = vector.load %arg3[%c0, %c0_0] : memref<8x2xf32, #tpu.memory_space<vmem>>, vector<8x1xf32>
    %c0_1 = arith.constant 0 : index
    %c1 = arith.constant 1 : index
    %1 = vector.load %arg3[%c0_1, %c1] : memref<8x2xf32, #tpu.memory_space<vmem>>, vector<8x1xf32>
    %c0_2 = arith.constant 0 : index
    %c0_3 = arith.constant 0 : index
    %2 = vector.load %arg2[%c0_2, %c0_3] : memref<8x128xf32, #tpu.memory_space<vmem>>, vector<8x128xf32>
    %3 = vector.broadcast %0 : vector<8x1xf32> to vector<8x128xf32>
    %4 = arith.mulf %3, %2 : vector<8x128xf32>
    %5 = vector.broadcast %1 : vector<8x1xf32> to vector<8x128xf32>
    %6 = arith.addf %4, %5 : vector<8x128xf32>
    %c0_4 = arith.constant 0 : index
    %c0_5 = arith.constant 0 : index
    %7 = vector.load %arg4[%c0_4, %c0_5] : memref<8x128xf32, #tpu.memory_space<vmem>>, vector<8x128xf32>
    tpu.vector_store %arg4[%c0_4, %c0_5], %6 {strides = array<i32>} : memref<8x128xf32, #tpu.memory_space<vmem>>, vector<8x128xf32>,
    return
  }
  func.func @transform_0(%arg0: i32, %arg1: i32) -> (i32, i32) {
    %c0_i32 = arith.constant 0 : i32
    return %arg0, %arg1 : i32, i32
  }
  func.func @transform_1(%arg0: i32, %arg1: i32) -> (i32, i32) {
    %c0_i32 = arith.constant 0 : i32
    %c0_i32_0 = arith.constant 0 : i32
    return %arg0, %c0_i32 : i32, i32
  }
  func.func @transform_2(%arg0: i32, %arg1: i32) -> (i32, i32) {
    %c0_i32 = arith.constant 0 : i32
    return %arg0, %arg1 : i32, i32
  }
}

</mosaic_0001>

<llo_original>
// kernel: affine_forward.1
$region0: #{affine_forward.1}
  #allocation0 [shape = 'u32[]', space=smem, size = 0x4, offset = 0x4, fixed_abs, tag = 'smem constant byte address 0x4 - core index']
  #allocation1 [shape = 'u32[144,128]{1,0:T(1,128)}', space=vmem, size = 0x12000, scoped, tag = 'internal scratch']
  %s0 = inlined_call_operand.vmem [shape: f32[8,256], index: 0, kind: input, shape index: {}]
  %s1 = inlined_call_operand.vmem [shape: f32[8,2], index: 1, kind: input, shape index: {}]
  %s2 = inlined_call_operand.vmem [shape: f32[8,256], index: 2, kind: output, shape index: {}]
  %s3 = sld [smem:[#allocation0]]
  $region41: #{affine_forward.1} parent=0
    _
  %s5 = ssub.s32 1, %s3
  %s6 = scalar_select 0, %s5, %s3
  loop: start=0, step=1, limit=4
  $region2: #{affine_forward.1} parent=0 // loop_pre_header
    _
  $region3: #{affine_forward.1} parent=0 // loop_header
    %s8 = sphi 0, %s12
    %p9 = scmp.ge.s32.totalorder %s8, 4
    %s15 = sphi 0, %s27
    %s16 = sphi 0, %s23
    %s17 = sphi 0, %s15
    %s18 = sphi 0, %s16
    %s19 = sphi 0, %s17
    %s20 = sphi 0, %s18
    %s32 = sphi 0, %s34
    %s35 = sphi 0, %s32
    %s36 = sphi 0, %s35
    %s52 = sphi 0, %s36
    %s58 = sphi 0, %s60
    %s61 = sphi 0, %s58
    %s62 = sphi 0, %s61
    %s78 = sphi 0, %s62
    %s86 = sphi 0, %s88
    %s89 = sphi 0, %s86
    %s90 = sphi 0, %s89
    %s106 = sphi 0, %s90
  $region4: #{affine_forward.1} parent=0 // loop_header_branch
    %11 = sbr.rel (%p9) target = $region8
  $region5: #{affine_forward.1} parent=0 // loop_body
    %s13 = ssub.s32 %s8, 1
    %s14 = ssub.s32 %s8, 2
    %s21 = sadd.s32 1, %s16
    %p22 = scmp.ge.s32.totalorder %s21, 2
    %s23 = scalar_select %p22, 0, %s21
    %s24 = sadd.s32 1, %s15
    %s25 = scalar_select %p22, %s24, %s15
    %p26 = scmp.ge.s32.totalorder %s25, 1
    %s27 = scalar_select %p26, 0, %s25
    %s28 = ssub.s32 %s15, %s27
    %s29 = ssub.s32 %s16, %s23
    %s30 = sor.u32 %s28, %s29
    %p31 = scmp.eq.s32.totalorder %s30, 0
    %s33 = sadd.s32 %s32, 1
    %s34 = scalar_select %p31, %s32, %s33
    %p37 = pneg %p31
    %p38 = scmp.eq.s32.totalorder %s8, 1
    %p39 = por %p37, %p38
    %p40 = scmp.ne.s32.totalorder %s32, %s35
    %p41 = scmp.eq.s32.totalorder %s8, 0
    %p42 = por %p40, %p41
    %p43 = scmp.ne.s32.totalorder %s32, %s35
    %p44 = scmp.eq.s32.totalorder %s13, 1
    %p45 = por %p43, %p44
    %p46 = scmp.ne.s32.totalorder %s35, %s36
    %p47 = scmp.eq.s32.totalorder %s13, 0
    %p48 = por %p46, %p47
    %p49 = scmp.ne.s32.totalorder %s35, %s36
    %p50 = scmp.eq.s32.totalorder %s14, 1
    %p51 = por %p49, %p50
    %p53 = scmp.ne.s32.totalorder %s36, %s52
    %p54 = scmp.eq.s32.totalorder %s14, 0
    %p55 = por %p53, %p54
    %s56 = ssub.s32 %s15, %s27
    %p57 = scmp.eq.s32.totalorder %s56, 0
    %s59 = sadd.s32 %s58, 1
    %s60 = scalar_select %p57, %s58, %s59
    %p63 = pneg %p57
    %p64 = scmp.eq.s32.totalorder %s8, 1
    %p65 = por %p63, %p64
    %p66 = scmp.ne.s32.totalorder %s58, %s61
    %p67 = scmp.eq.s32.totalorder %s8, 0
    %p68 = por %p66, %p67
    %p69 = scmp.ne.s32.totalorder %s58, %s61
    %p70 = scmp.eq.s32.totalorder %s13, 1
    %p71 = por %p69, %p70
    %p72 = scmp.ne.s32.totalorder %s61, %s62
    %p73 = scmp.eq.s32.totalorder %s13, 0
    %p74 = por %p72, %p73
    %p75 = scmp.ne.s32.totalorder %s61, %s62
    %p76 = scmp.eq.s32.totalorder %s14, 1
    %p77 = por %p75, %p76
    %p79 = scmp.ne.s32.totalorder %s62, %s78
    %p80 = scmp.eq.s32.totalorder %s14, 0
    %p81 = por %p79, %p80
    %s82 = ssub.s32 %s15, %s27
    %s83 = ssub.s32 %s16, %s23
    %s84 = sor.u32 %s82, %s83
    %p85 = scmp.eq.s32.totalorder %s84, 0
    %s87 = sadd.s32 %s86, 1
    %s88 = scalar_select %p85, %s86, %s87
    %p91 = pneg %p85
    %p92 = scmp.eq.s32.totalorder %s8, 1
    %p93 = por %p91, %p92
    %p94 = scmp.ne.s32.totalorder %s86, %s89
    %p95 = scmp.eq.s32.totalorder %s8, 0
    %p96 = por %p94, %p95
    %p97 = scmp.ne.s32.totalorder %s86, %s89
    %p98 = scmp.eq.s32.totalorder %s13, 1
    %p99 = por %p97, %p98
    %p100 = scmp.ne.s32.totalorder %s89, %s90
    %p101 = scmp.eq.s32.totalorder %s13, 0
    %p102 = por %p100, %p101
    %p103 = scmp.ne.s32.totalorder %s89, %s90
    %p104 = scmp.eq.s32.totalorder %s14, 1
    %p105 = por %p103, %p104
    %p107 = scmp.ne.s32.totalorder %s90, %s106
    %p108 = scmp.eq.s32.totalorder %s14, 0
    %p109 = por %p107, %p108
    %p110 = scmp.le.s32.totalorder 1, %s8
    %p111 = scmp.lt.s32.totalorder %s8, 3
    %p112 = pnand %p110, %p111
    %p113 = pneg %p112
    // Predicated region
    $region9: #{affine_forward.1} parent=5 // pred_check
      _
    $region10: #{affine_forward.1} parent=5 // pred_check_branch
      %115 = sbr.rel (%p112) target = $region12
    $region11: #{affine_forward.1} parent=5 // pred_region
      %s116 = ssub.s32 %s8, 1
      // Predicated region
      $region13: #{affine_forward.1} parent=11 // pred_check
        %p117 = pneg %p74
      $region14: #{affine_forward.1} parent=11 // pred_check_branch
        %119 = sbr.rel (%p117) target = $region16
      $region15: #{affine_forward.1} parent=11 // pred_region
        %p120 = scmp.lt.s32.totalorder %s17, 0
        %s121 = scalar_select %p120, %s17, 0
        %s122 = smul.addr %s121, 8
        %s123 = scalar_lea.vmem %s1, %s122
      $region16: #{affine_forward.1} parent=11 // pred_fallthru
        _
    $region12: #{affine_forward.1} parent=5 // pred_fallthru
      _
    %p124 = scmp.lt.s32.totalorder %s8, 2
    // Predicated region
    $region17: #{affine_forward.1} parent=5 // pred_check
      %p125 = pneg %p124
    $region18: #{affine_forward.1} parent=5 // pred_check_branch
      %127 = sbr.rel (%p125) target = $region20
    $region19: #{affine_forward.1} parent=5 // pred_region
      // Predicated region
      $region21: #{affine_forward.1} parent=19 // pred_check
        %p128 = pneg %p42
      $region22: #{affine_forward.1} parent=19 // pred_check_branch
        %130 = sbr.rel (%p128) target = $region24
      $region23: #{affine_forward.1} parent=19 // pred_region
        %p131 = scmp.lt.s32.totalorder %s15, 0
        %s132 = scalar_select %p131, %s15, 0
        %p133 = scmp.lt.s32.totalorder %s16, 1
        %s134 = scalar_select %p133, %s16, 1
        %s135 = smul.addr %s132, 2
        %s136 = sadd.s32 %s134, %s135
        %s137 = smul.addr %s136, 8
        %s138 = scalar_lea.vmem %s0, %s137
      $region24: #{affine_forward.1} parent=19 // pred_fallthru
        _
    $region20: #{affine_forward.1} parent=5 // pred_fallthru
      _
    %p139 = scmp.le.s32.totalorder 1, %s8
    %p140 = scmp.lt.s32.totalorder %s8, 3
    %p141 = pnand %p139, %p140
    %p142 = pneg %p141
    // Predicated region
    $region25: #{affine_forward.1} parent=5 // pred_check
      _
    $region26: #{affine_forward.1} parent=5 // pred_check_branch
      %144 = sbr.rel (%p141) target = $region28
    $region27: #{affine_forward.1} parent=5 // pred_region
      %s145 = ssub.s32 %s8, 1
      %p146 = scmp.lt.s32.totalorder %s17, 0
      %s147 = scalar_select %p146, %s17, 0
      %p148 = scmp.lt.s32.totalorder %s18, 1
      %s149 = scalar_select %p148, %s18, 1
      %s150 = smul.addr %s147, 2
      %s151 = sadd.s32 %s149, %s150
      %s152 = smul.addr %s151, 8
      %s153 = scalar_lea.vmem %s0, %s152
      %p154 = pneg %p48
      %p155 = pneg %p45
      %p156 = scmp.lt.s32.totalorder %s17, 0
      %s157 = scalar_select %p156, %s17, 0
      %s158 = smul.addr %s157, 8
      %s159 = scalar_lea.vmem %s1, %s158
      %p160 = pneg %p74
      %p161 = pneg %p71
      %p162 = pneg %p102
      %p163 = pneg %p99
      %p164 = scmp.lt.s32.totalorder %s17, 0
      %s165 = scalar_select %p164, %s17, 0
      %p166 = scmp.lt.s32.totalorder %s18, 1
      %s167 = scalar_select %p166, %s18, 1
      %s168 = smul.addr %s165, 2
      %s169 = sadd.s32 %s167, %s168
      %s170 = smul.addr %s169, 8
      %s171 = scalar_lea.vmem %s2, %s170
      %p172 = scmp.lt.s32.totalorder %s17, 0
      %s173 = scalar_select %p172, %s17, 0
      %p174 = scmp.lt.s32.totalorder %s18, 1
      %s175 = scalar_select %p174, %s18, 1
      %s176 = smul.addr %s173, 2
      %s177 = sadd.s32 %s175, %s176
      %s178 = smul.addr %s177, 8
      %s179 = scalar_lea.vmem %s0, %s178
      %p180 = scmp.lt.s32.totalorder %s17, 0
      %s181 = scalar_select %p180, %s17, 0
      %s182 = smul.addr %s181, 8
      %s183 = scalar_lea.vmem %s1, %s182
      %p184 = scmp.lt.s32.totalorder %s17, 0
      %s185 = scalar_select %p184, %s17, 0
      %p186 = scmp.lt.s32.totalorder %s18, 1
      %s187 = scalar_select %p186, %s18, 1
      %s188 = smul.addr %s185, 2
      %s189 = sadd.s32 %s187, %s188
      %s190 = smul.addr %s189, 8
      %s191 = scalar_lea.vmem %s2, %s190
      %v192 = vld [vmem:[%s183] sm:$0xff]
      %v193 = vld [vmem:[%s179] sm:$0xff]
      %195 = vset.pattern.permute.xlu0 0
      %196 = vperm.xlu0 %195, %v192
      %v197 = vpop.permute.xlu0 %196
      %v199 = vmul.f32 %v197, %v193
      %200 = vset.pattern.permute.xlu0 1
      %201 = vperm.xlu0 %200, %v192
      %v202 = vpop.permute.xlu0 %201
      %v204 = vadd.f32 %v199, %v202
      %205 = vst [vmem:[%s191] sm:$0xff] %v204
      %p206 = scmp.lt.s32.totalorder %s17, 0
      %s207 = scalar_select %p206, %s17, 0
      %p208 = scmp.lt.s32.totalorder %s18, 1
      %s209 = scalar_select %p208, %s18, 1
      %s210 = smul.addr %s207, 2
      %s211 = sadd.s32 %s209, %s210
      %s212 = smul.addr %s211, 8
      %s213 = scalar_lea.vmem %s2, %s212
      // Predicated region
      $region29: #{affine_forward.1} parent=27 // pred_check
        %p214 = pneg %p99
      $region30: #{affine_forward.1} parent=27 // pred_check_branch
        %216 = sbr.rel (%p214) target = $region32
      $region31: #{affine_forward.1} parent=27 // pred_region
        _
      $region32: #{affine_forward.1} parent=27 // pred_fallthru
        _
    $region28: #{affine_forward.1} parent=5 // pred_fallthru
      _
    %p217 = scmp.le.s32.totalorder 2, %s8
    // Predicated region
    $region33: #{affine_forward.1} parent=5 // pred_check
      %p218 = pneg %p217
    $region34: #{affine_forward.1} parent=5 // pred_check_branch
      %220 = sbr.rel (%p218) target = $region36
    $region35: #{affine_forward.1} parent=5 // pred_region
      %s221 = ssub.s32 %s8, 2
      // Predicated region
      $region37: #{affine_forward.1} parent=35 // pred_check
        %p222 = pneg %p105
      $region38: #{affine_forward.1} parent=35 // pred_check_branch
        %224 = sbr.rel (%p222) target = $region40
      $region39: #{affine_forward.1} parent=35 // pred_region
        %p225 = scmp.lt.s32.totalorder %s19, 0
        %s226 = scalar_select %p225, %s19, 0
        %p227 = scmp.lt.s32.totalorder %s20, 1
        %s228 = scalar_select %p227, %s20, 1
        %s229 = smul.addr %s226, 2
        %s230 = sadd.s32 %s228, %s229
        %s231 = smul.addr %s230, 8
        %s232 = scalar_lea.vmem %s2, %s231
      $region40: #{affine_forward.1} parent=35 // pred_fallthru
        _
    $region36: #{affine_forward.1} parent=5 // pred_fallthru
      _
  $region6: #{affine_forward.1} parent=0 // loop_footer
    %s12 = sadd.s32 1, %s8
  $region7: #{affine_forward.1} parent=0 // loop_footer_branch
    %7 = sbr.rel target = $region3
  $region8: #{affine_forward.1} parent=0 // loop_exit
    _

</llo_original>
